<compile_context>
chip_gen: v6e
topology: v6e:2x2x1
jax: 0.10.0
libtpu: 0.0.40
codegen_flags: <defaults>
</compile_context>

<pallas_src>
import functools

import jax
import jax.numpy as jnp
from jax.experimental import pallas as pl
from jax.experimental.pallas import tpu as pltpu


def _round_up(x, m):
    return (x + m - 1) // m * m


def _cdiv(a, b):
    return (a + b - 1) // b


def _physical_vmem_bytes():
    try:
        info = pltpu.get_tpu_info()
        v = getattr(info, "vmem_capacity_bytes", None)
        if v:
            return int(v)
    except Exception:
        pass
    return 64 * 1024 * 1024  # conservative fallback (v7x per-TC size)


def _ffn_ln_kernel(x_ref, w1_ref, b1_ref, w2_ref, params_ref, o_ref, acc_ref,
                   *, d_valid, eps, mm_dtype):
    """One (row-tile, d_hid-chunk) grid step.

    acc_ref holds the f32 (tm, d_in_p) partial of the second matmul; the
    residual + LayerNorm epilogue runs only on the last d_hid chunk.
    """
    k = pl.program_id(1)

    @pl.when(k == 0)
    def _():
        acc_ref[...] = jnp.zeros_like(acc_ref)

    x = x_ref[...]                                   # (tm, d_in_p), native dtype
    xm = x.astype(mm_dtype)

    # first matmul: this d_hid chunk of W1, f32 accumulation on the MXU
    h = jnp.dot(xm, w1_ref[...].astype(mm_dtype),
                preferred_element_type=jnp.float32)
    h = jnp.maximum(h + b1_ref[...].astype(jnp.float32), 0.0)

    # second matmul chunk, accumulated into the resident f32 scratch
    acc_ref[...] += jnp.dot(h.astype(mm_dtype), w2_ref[...].astype(mm_dtype),
                            preferred_element_type=jnp.float32)

    @pl.when(k == pl.num_programs(1) - 1)
    def _():
        prm = params_ref[...].astype(jnp.float32)    # (3, d_in_p): b2, gamma, beta
        b2 = prm[0:1]
        gamma = prm[1:2]
        beta = prm[2:3]

        # dropout == identity in eval mode; residual add in f32
        y = acc_ref[...] + b2 + x.astype(jnp.float32)

        d_pad = y.shape[-1]
        inv_n = 1.0 / d_valid
        # pad lanes of y are exact zeros (zero-padded x / W2 cols / b2), so the
        # row sum only sees real lanes; mask the centered values so padding never
        # pollutes the variance.
        mean = jnp.sum(y, axis=-1, keepdims=True) * inv_n
        if d_pad == d_valid:
            diff = y - mean
        else:
            lane = jax.lax.broadcasted_iota(jnp.int32, y.shape, dimension=1)
            diff = jnp.where(lane < d_valid, y - mean, 0.0)
        var = jnp.sum(diff * diff, axis=-1, keepdims=True) * inv_n
        y = diff * jax.lax.rsqrt(var + eps)          # rsqrt -> EUP slot (free-ish)
        y = y * gamma + beta
        o_ref[...] = y.astype(o_ref.dtype)


def positionwise_feed_forward(x, w1, b1, w2, b2, gamma, beta, *,
                              tm=256, tk_max=1024, mm_dtype=None, eps=1e-6):
    """x: (B, S, d_in) -> LayerNorm(x + relu(x @ w1 + b1) @ w2 + b2)."""
    B, S, d_in = x.shape
    d_hid = w1.shape[1]
    M = B * S

    mm_dtype = jnp.dtype(mm_dtype) if mm_dtype is not None else jnp.dtype(x.dtype)
    x_bpe = jnp.dtype(x.dtype).itemsize
    w_bpe = jnp.dtype(w1.dtype).itemsize
    mm_bpe = mm_dtype.itemsize

    # lane-align feature dims (multiples of 128) -> unmasked full-lane vregs/stores
    d_in_p = _round_up(d_in, 128)
    d_hid_p = _round_up(d_hid, 128)

    # row tile rounded to the dtype's sublane packing (8 f32 / 16 bf16 / 32 int8)
    sub = max(8, 32 // x_bpe)
    tm = max(sub, min(_round_up(tm, sub), _round_up(M, sub)))

    # generation-aware VMEM budget with ~15% headroom for compiler scratch
    budget = int(0.85 * _physical_vmem_bytes())

    def vmem_est(tm_, tk_):
        return int(
            2 * 2 * tm_ * d_in_p * x_bpe                 # x + out tiles, double-buffered
            + 2 * 2 * d_in_p * tk_ * w_bpe               # W1 + W2 chunks, double-buffered
            + 2 * 8 * (tk_ + d_in_p) * w_bpe             # b1 chunk + stacked LN params
            + tm_ * d_in_p * 4                           # f32 accumulator scratch
            + tm_ * tk_ * (4 + mm_bpe)                   # f32 h + matmul-dtype copy
            + 2 * tm_ * d_in_p * 4)                      # f32 epilogue temporaries

    tk_cap = min(d_hid_p, _round_up(tk_max, 128))
    while vmem_est(tm, tk_cap) > budget and tk_cap > 128:
        tk_cap = max(128, _round_up(tk_cap // 2, 128))
    while vmem_est(tm, tk_cap) > budget and tm > sub:
        tm = max(sub, _round_up(tm // 2, sub))
    m_pad = _round_up(M, tm)

    # balanced d_hid chunking: nk chunks of width tk (multiple of 128)
    nk = _cdiv(d_hid_p, tk_cap)
    tk = _round_up(_cdiv(d_hid_p, nk), 128)
    d_hid_pp = nk * tk

    vmem_limit = int(min(max(int(1.25 * vmem_est(tm, tk)), 32 * 1024 * 1024), budget))

    # host-side padding — skipped entirely when shapes are already aligned.
    # (In production, pre-pad the params once at init rather than per call.)
    x2 = x.reshape(M, d_in)
    pad_x = (m_pad != M) or (d_in_p != d_in)
    if pad_x:
        x2 = jnp.pad(x2, ((0, m_pad - M), (0, d_in_p - d_in)))

    if (d_in_p != d_in) or (d_hid_pp != d_hid):
        w1_p = jnp.pad(w1, ((0, d_in_p - d_in), (0, d_hid_pp - d_hid)))
        w2_p = jnp.pad(w2, ((0, d_hid_pp - d_hid), (0, d_in_p - d_in)))
        b1_p = jnp.pad(b1, (0, d_hid_pp - d_hid)).reshape(1, d_hid_pp)
        params_p = jnp.stack([jnp.pad(b2, (0, d_in_p - d_in)),
                              jnp.pad(gamma, (0, d_in_p - d_in)),
                              jnp.pad(beta, (0, d_in_p - d_in))], axis=0)
    else:
        w1_p, w2_p = w1, w2
        b1_p = b1.reshape(1, d_hid_pp)
        params_p = jnp.stack([b2, gamma, beta], axis=0)

    grid = (m_pad // tm, nk)

    flops = 4 * m_pad * d_in_p * d_hid_pp + 10 * m_pad * d_in_p
    bytes_accessed = (2 * m_pad * d_in_p * x_bpe
                      + grid[0] * 2 * d_in_p * d_hid_pp * w_bpe
                      + (d_hid_pp + 3 * d_in_p) * w_bpe)

    kernel = functools.partial(_ffn_ln_kernel, d_valid=d_in, eps=eps,
                               mm_dtype=mm_dtype)

    out = pl.pallas_call(
        kernel,
        out_shape=jax.ShapeDtypeStruct((m_pad, d_in_p), x.dtype),
        grid_spec=pltpu.PrefetchScalarGridSpec(
            num_scalar_prefetch=0,
            grid=grid,
            in_specs=[
                pl.BlockSpec((tm, d_in_p), lambda i, k: (i, 0)),   # x row tile
                pl.BlockSpec((d_in_p, tk), lambda i, k: (0, k)),   # W1 d_hid chunk
                pl.BlockSpec((1, tk), lambda i, k: (0, k)),        # b1 chunk
                pl.BlockSpec((tk, d_in_p), lambda i, k: (k, 0)),   # W2 d_hid chunk
                pl.BlockSpec((3, d_in_p), lambda i, k: (0, 0)),    # [b2, gamma, beta]
            ],
            out_specs=pl.BlockSpec((tm, d_in_p), lambda i, k: (i, 0)),
            scratch_shapes=[pltpu.VMEM((tm, d_in_p), jnp.float32)],
        ),
        compiler_params=pltpu.CompilerParams(
            dimension_semantics=("parallel", "arbitrary"),
            vmem_limit_bytes=vmem_limit),
        cost_estimate=pl.CostEstimate(flops=flops,
                                      transcendentals=m_pad,
                                      bytes_accessed=bytes_accessed),
    )(x2, w1_p, b1_p, w2_p, params_p)

    if pad_x:
        out = out[:M, :d_in]
    return out.reshape(B, S, d_in)


def init_params(key, d_in, d_hid, dtype=jnp.float32):
    """Deterministic init mimicking nn.Linear defaults (uniform +/- 1/sqrt(fan_in))."""
    k1, k2, k3, k4 = jax.random.split(key, 4)
    lim1 = 1.0 / (d_in ** 0.5)
    lim2 = 1.0 / (d_hid ** 0.5)
    # weights stored already transposed: W1 is (d_in, d_hid) so y = x @ W1
    w1 = jax.random.uniform(k1, (d_in, d_hid), dtype, -lim1, lim1)
    b1 = jax.random.uniform(k2, (d_hid,), dtype, -lim1, lim1)
    w2 = jax.random.uniform(k3, (d_hid, d_in), dtype, -lim2, lim2)
    b2 = jax.random.uniform(k4, (d_in,), dtype, -lim2, lim2)
    gamma = jnp.ones((d_in,), dtype)
    beta = jnp.zeros((d_in,), dtype)
    return w1, b1, w2, b2, gamma, beta


def reference(x, w1, b1, w2, b2, gamma, beta, eps=1e-6):
    h = jnp.maximum(x @ w1 + b1, 0.0)
    y = h @ w2 + b2 + x
    mean = jnp.mean(y, axis=-1, keepdims=True)
    var = jnp.mean((y - mean) ** 2, axis=-1, keepdims=True)
    return (y - mean) * jax.lax.rsqrt(var + eps) * gamma + beta


if __name__ == "__main__":
    root = jax.random.PRNGKey(0)
    k1, k2 = jax.random.split(root)

    # 1) tiny unaligned shapes (exercise padding + masked-LN path, single d_hid chunk)
    B, S, d_in, d_hid = 2, 8, 32, 64
    kx, kp = jax.random.split(k1)
    x = jax.random.normal(kx, (B, S, d_in), jnp.float32)
    params = init_params(kp, d_in, d_hid)
    out = jax.block_until_ready(positionwise_feed_forward(x, *params))
    ref = reference(x, *params)
    assert out.shape == (B, S, d_in)
    assert jnp.allclose(out, ref, atol=1e-4, rtol=1e-4), "mismatch (unaligned case)"

    # 2) lane-aligned shapes, multi-chunk d_hid reduction and multiple row tiles
    B, S, d_in, d_hid = 2, 64, 128, 256
    kx, kp = jax.random.split(k2)
    x = jax.random.normal(kx, (B, S, d_in), jnp.float32)
    params = init_params(kp, d_in, d_hid)
    out = jax.block_until_ready(
        positionwise_feed_forward(x, *params, tm=64, tk_max=128))
    ref = reference(x, *params)
    assert out.shape == (B, S, d_in)
    assert jnp.allclose(out, ref, atol=1e-4, rtol=1e-4), "mismatch (multi-chunk case)"

    print("KERNEL_OK")
</pallas_src>

<mosaic_0001>
module attributes {stable_mosaic.version = 11 : i64} {
  func.func @_ffn_ln_kernel(%arg0: i32, %arg1: i32, %arg2: memref<16x128xf32, #tpu.memory_space<vmem>>, %arg3: memref<128x128xf32, #tpu.memory_space<vmem>>, %arg4: memref<1x128xf32, #tpu.memory_space<vmem>>, %arg5: memref<128x128xf32, #tpu.memory_space<vmem>>, %arg6: memref<3x128xf32, #tpu.memory_space<vmem>>, %arg7: memref<16x128xf32, #tpu.memory_space<vmem>>, %arg8: memref<16x128xf32, #tpu.memory_space<vmem>>) attributes {dimension_semantics = [#tpu.dimension_semantics<parallel>, #tpu.dimension_semantics<arbitrary>], iteration_bounds = array<i64: 1, 1>, scalar_prefetch = 0 : i64, scratch_operands = 1 : i64, tpu.core_type = #tpu.core_type<tc>, window_params = [{transform_indices = @transform_0, window_bounds = array<i64: 16, 128>}, {transform_indices = @transform_1, window_bounds = array<i64: 128, 128>}, {transform_indices = @transform_2, window_bounds = array<i64: 1, 128>}, {transform_indices = @transform_3, window_bounds = array<i64: 128, 128>}, {pipeline_mode = #tpu.pipeline_mode<synchronous>, transform_indices = @transform_4, window_bounds = array<i64: 3, 128>}, {transform_indices = @transform_5, window_bounds = array<i64: 16, 128>}]} {
    %c0_i32 = arith.constant 0 : i32
    %0 = arith.cmpi eq, %arg1, %c0_i32 : i32
    %1 = arith.extui %0 : i1 to i32
    %c0_i32_0 = arith.constant 0 : i32
    %2 = arith.cmpi ne, %1, %c0_i32_0 : i32
    scf.if %2 {
      %cst_16 = arith.constant 0.000000e+00 : f32
      %19 = vector.broadcast %cst_16 : f32 to vector<16x128xf32>
      %c0_17 = arith.constant 0 : index
      %c0_18 = arith.constant 0 : index
      %20 = vector.load %arg8[%c0_17, %c0_18] : memref<16x128xf32, #tpu.memory_space<vmem>>, vector<16x128xf32>
      tpu.vector_store %arg8[%c0_17, %c0_18], %19 {strides = array<i32>} : memref<16x128xf32, #tpu.memory_space<vmem>>, vector<16x128xf32>,
    } else {
    }
    %c0 = arith.constant 0 : index
    %c0_1 = arith.constant 0 : index
    %3 = vector.load %arg2[%c0, %c0_1] : memref<16x128xf32, #tpu.memory_space<vmem>>, vector<16x128xf32>
    %c0_2 = arith.constant 0 : index
    %c0_3 = arith.constant 0 : index
    %4 = vector.load %arg3[%c0_2, %c0_3] : memref<128x128xf32, #tpu.memory_space<vmem>>, vector<128x128xf32>
    %cst = arith.constant dense<0.000000e+00> : vector<16x128xf32>
    %5 = tpu.matmul %3, %4, %cst {dimension_numbers = #tpu.dot_dimension_numbers<[1], [0], [0], [1], [0, 0, 1, 1], [], []>} : vector<16x128xf32>, vector<128x128xf32>, vector<16x128xf32> -> vector<16x128xf32>
    %c0_4 = arith.constant 0 : index
    %c0_5 = arith.constant 0 : index
    %6 = vector.load %arg4[%c0_4, %c0_5] : memref<1x128xf32, #tpu.memory_space<vmem>>, vector<1x128xf32>
    %7 = vector.broadcast %6 : vector<1x128xf32> to vector<16x128xf32>
    %8 = arith.addf %5, %7 : vector<16x128xf32>
    %cst_6 = arith.constant 0.000000e+00 : f32
    %9 = vector.broadcast %cst_6 : f32 to vector<16x128xf32>
    %10 = arith.maximumf %8, %9 : vector<16x128xf32>
    %c0_7 = arith.constant 0 : index
    %c0_8 = arith.constant 0 : index
    %11 = vector.load %arg8[%c0_7, %c0_8] : memref<16x128xf32, #tpu.memory_space<vmem>>, vector<16x128xf32>
    %c0_9 = arith.constant 0 : index
    %c0_10 = arith.constant 0 : index
    %12 = vector.load %arg5[%c0_9, %c0_10] : memref<128x128xf32, #tpu.memory_space<vmem>>, vector<128x128xf32>
    %cst_11 = arith.constant dense<0.000000e+00> : vector<16x128xf32>
    %13 = tpu.matmul %10, %12, %cst_11 {dimension_numbers = #tpu.dot_dimension_numbers<[1], [0], [0], [1], [0, 0, 1, 1], [], []>} : vector<16x128xf32>, vector<128x128xf32>, vector<16x128xf32> -> vector<16x128xf32>
    %14 = arith.addf %11, %13 : vector<16x128xf32>
    %c0_12 = arith.constant 0 : index
    %c0_13 = arith.constant 0 : index
    %15 = vector.load %arg8[%c0_12, %c0_13] : memref<16x128xf32, #tpu.memory_space<vmem>>, vector<16x128xf32>
    tpu.vector_store %arg8[%c0_12, %c0_13], %14 {strides = array<i32>} : memref<16x128xf32, #tpu.memory_space<vmem>>, vector<16x128xf32>,
    %c0_i32_14 = arith.constant 0 : i32
    %16 = arith.cmpi eq, %arg1, %c0_i32_14 : i32
    %17 = arith.extui %16 : i1 to i32
    %c0_i32_15 = arith.constant 0 : i32
    %18 = arith.cmpi ne, %17, %c0_i32_15 : i32
    scf.if %18 {
      %c0_16 = arith.constant 0 : index
      %c0_17 = arith.constant 0 : index
      %19 = vector.load %arg6[%c0_16, %c0_17] : memref<3x128xf32, #tpu.memory_space<vmem>>, vector<3x128xf32>
      %20 = vector.extract_strided_slice %19 {offsets = [0, 0], sizes = [1, 128], strides = [1, 1]} : vector<3x128xf32> to vector<1x128xf32>
      %21 = vector.extract_strided_slice %19 {offsets = [1, 0], sizes = [1, 128], strides = [1, 1]} : vector<3x128xf32> to vector<1x128xf32>
      %22 = vector.extract_strided_slice %19 {offsets = [2, 0], sizes = [1, 128], strides = [1, 1]} : vector<3x128xf32> to vector<1x128xf32>
      %c0_18 = arith.constant 0 : index
      %c0_19 = arith.constant 0 : index
      %23 = vector.load %arg8[%c0_18, %c0_19] : memref<16x128xf32, #tpu.memory_space<vmem>>, vector<16x128xf32>
      %24 = vector.broadcast %20 : vector<1x128xf32> to vector<16x128xf32>
      %25 = arith.addf %23, %24 : vector<16x128xf32>
      %26 = arith.addf %25, %3 : vector<16x128xf32>
      %cst_20 = arith.constant dense<0.000000e+00> : vector<16xf32>
      %27 = vector.multi_reduction <add>, %26, %cst_20 [1] : vector<16x128xf32> to vector<16xf32>
      %28 = vector.shape_cast %27 : vector<16xf32> to vector<16x1xf32>
      %cst_21 = arith.constant 3.125000e-02 : f32
      %29 = vector.broadcast %cst_21 : f32 to vector<16x1xf32>
      %30 = arith.mulf %28, %29 : vector<16x1xf32>
      %31 = tpu.iota {dimensions = array<i32: 1>} : vector<16x128xi32>
      %c32_i32 = arith.constant 32 : i32
      %32 = vector.broadcast %c32_i32 : i32 to vector<16x128xi32>
      %33 = arith.cmpi slt, %31, %32 : vector<16x128xi32>
      %34 = vector.broadcast %30 : vector<16x1xf32> to vector<16x128xf32>
      %35 = arith.subf %26, %34 : vector<16x128xf32>
      %cst_22 = arith.constant 0.000000e+00 : f32
      %36 = vector.broadcast %cst_22 : f32 to vector<16x128xf32>
      %37 = arith.select %33, %35, %36 : vector<16x128xi1>, vector<16x128xf32>
      %38 = arith.mulf %37, %37 : vector<16x128xf32>
      %cst_23 = arith.constant dense<0.000000e+00> : vector<16xf32>
      %39 = vector.multi_reduction <add>, %38, %cst_23 [1] : vector<16x128xf32> to vector<16xf32>
      %40 = vector.shape_cast %39 : vector<16xf32> to vector<16x1xf32>
      %cst_24 = arith.constant 3.125000e-02 : f32
      %41 = vector.broadcast %cst_24 : f32 to vector<16x1xf32>
      %42 = arith.mulf %40, %41 : vector<16x1xf32>
      %cst_25 = arith.constant 9.99999997E-7 : f32
      %43 = vector.broadcast %cst_25 : f32 to vector<16x1xf32>
      %44 = arith.addf %42, %43 : vector<16x1xf32>
      %45 = math.rsqrt %44 : vector<16x1xf32>
      %46 = vector.broadcast %45 : vector<16x1xf32> to vector<16x128xf32>
      %47 = arith.mulf %37, %46 : vector<16x128xf32>
      %48 = vector.broadcast %21 : vector<1x128xf32> to vector<16x128xf32>
      %49 = arith.mulf %47, %48 : vector<16x128xf32>
      %50 = vector.broadcast %22 : vector<1x128xf32> to vector<16x128xf32>
      %51 = arith.addf %49, %50 : vector<16x128xf32>
      %c0_26 = arith.constant 0 : index
      %c0_27 = arith.constant 0 : index
      %52 = vector.load %arg7[%c0_26, %c0_27] : memref<16x128xf32, #tpu.memory_space<vmem>>, vector<16x128xf32>
      tpu.vector_store %arg7[%c0_26, %c0_27], %51 {strides = array<i32>} : memref<16x128xf32, #tpu.memory_space<vmem>>, vector<16x128xf32>,
    } else {
    }
    return
  }
  func.func @transform_0(%arg0: i32, %arg1: i32) -> (i32, i32) {
    %c0_i32 = arith.constant 0 : i32
    %c0_i32_0 = arith.constant 0 : i32
    return %arg0, %c0_i32 : i32, i32
  }
  func.func @transform_1(%arg0: i32, %arg1: i32) -> (i32, i32) {
    %c0_i32 = arith.constant 0 : i32
    %c0_i32_0 = arith.constant 0 : i32
    return %c0_i32, %arg1 : i32, i32
  }
  func.func @transform_2(%arg0: i32, %arg1: i32) -> (i32, i32) {
    %c0_i32 = arith.constant 0 : i32
    %c0_i32_0 = arith.constant 0 : i32
    return %c0_i32, %arg1 : i32, i32
  }
  func.func @transform_3(%arg0: i32, %arg1: i32) -> (i32, i32) {
    %c0_i32 = arith.constant 0 : i32
    %c0_i32_0 = arith.constant 0 : i32
    return %arg1, %c0_i32 : i32, i32
  }
  func.func @transform_4(%arg0: i32, %arg1: i32) -> (i32, i32) {
    %c0_i32 = arith.constant 0 : i32
    %c0_i32_0 = arith.constant 0 : i32
    %c0_i32_1 = arith.constant 0 : i32
    return %c0_i32, %c0_i32_0 : i32, i32
  }
  func.func @transform_5(%arg0: i32, %arg1: i32) -> (i32, i32) {
    %c0_i32 = arith.constant 0 : i32
    %c0_i32_0 = arith.constant 0 : i32
    return %arg0, %c0_i32 : i32, i32
  }
}

</mosaic_0001>

<llo_original>
// kernel: tpu_custom_call.1
$region0: #{tpu_custom_call.1}
  #allocation0 [shape = 'u32[]', space=smem, size = 0x4, offset = 0x4, fixed_abs, tag = 'smem constant byte address 0x4 - core index']
  #allocation1 [shape = 'u32[144,128]{1,0:T(1,128)}', space=vmem, size = 0x12000, scoped, tag = 'internal scratch']
  #allocation2 [shape = 'f32[16,128]{1,0:T(8,128)}', space=vmem, size = 0x2000, scoped, tag = 'scratch operand']
  %s0 = inlined_call_operand.hbm [shape: f32[16,128], index: 0, kind: input, shape index: {}]
  %s1 = inlined_call_operand.hbm [shape: f32[128,128], index: 1, kind: input, shape index: {}]
  %s2 = inlined_call_operand.vmem [shape: f32[1,128], index: 2, kind: input, shape index: {}]
  %s3 = inlined_call_operand.hbm [shape: f32[128,128], index: 3, kind: input, shape index: {}]
  %s4 = inlined_call_operand.vmem [shape: f32[3,128], index: 4, kind: input, shape index: {}]
  %s5 = inlined_call_operand.hbm [shape: f32[16,128], index: 5, kind: output, shape index: {}]
  %s6 = sld [smem:[#allocation0]]
  $region50: #{tpu_custom_call.1} parent=0
    _
  %s8 = ssub.s32 1, %s6
  %s9 = scalar_select 0, %s8, %s6
  $region1: #{tpu_custom_call.1} parent=0
    #allocation3 [shape = 'u8[8192]{0}', space=vmem, size = 0x2000, scoped, tag = 'input window, operand 0, single buffered']
    #allocation4 [shape = 's32[1]{0}', space=sflag, size = 0x4, scoped, tag = 'scoped memory for tpu_custom_call.1']
    #allocation5 [shape = 's32[1]{0}', space=sflag, size = 0x4, scoped, tag = 'scoped memory for tpu_custom_call.1']
    #allocation6 [shape = 'u8[65536]{0}', space=vmem, size = 0x10000, scoped, tag = 'input window, operand 1, single buffered']
    #allocation7 [shape = 's32[1]{0}', space=sflag, size = 0x4, scoped, tag = 'scoped memory for tpu_custom_call.1']
    #allocation8 [shape = 'u8[65536]{0}', space=vmem, size = 0x10000, scoped, tag = 'input window, operand 3, single buffered']
    #allocation9 [shape = 'u8[8192]{0}', space=vmem, size = 0x2000, scoped, tag = 'output window, operand 0, single buffered']
    %10 = vsyncpa [#allocation4], 0
    %11 = vsyncpa [#allocation7], 0
    %12 = vsyncpa [#allocation5], 0
    // Predicated region
    $region2: #{tpu_custom_call.1} parent=1 // pred_check
      _
    $region3: #{tpu_custom_call.1} parent=1 // pred_check_branch
      %14 = sbr.rel (0) target = $region5
    $region4: #{tpu_custom_call.1} parent=1 // pred_region
      %s16 = ssub.s32 256, 256
      %17 = vsyncadd [#allocation4], %s16
      %s18 = sshll.u32 [#allocation3], 4
      %s19 = int_to_ptr.vmem [resolvable:$true] %s18
      %24 = dma.hbm_to_vmem [thread:$0]  %s0, 256, %s19, [#allocation4], 128, 128, 8
    $region5: #{tpu_custom_call.1} parent=1 // pred_fallthru
      _
    // Predicated region
    $region6: #{tpu_custom_call.1} parent=1 // pred_check
      _
    $region7: #{tpu_custom_call.1} parent=1 // pred_check_branch
      %26 = sbr.rel (0) target = $region9
    $region8: #{tpu_custom_call.1} parent=1 // pred_region
      %s28 = ssub.s32 2048, 2048
      %29 = vsyncadd [#allocation7], %s28
      %s30 = sshll.u32 [#allocation6], 4
      %s31 = int_to_ptr.vmem [resolvable:$true] %s30
      %36 = dma.hbm_to_vmem [thread:$0]  %s1, 2048, %s31, [#allocation7], 128, 128, 8
    $region9: #{tpu_custom_call.1} parent=1 // pred_fallthru
      _
    // Predicated region
    $region10: #{tpu_custom_call.1} parent=1 // pred_check
      _
    $region11: #{tpu_custom_call.1} parent=1 // pred_check_branch
      %38 = sbr.rel (0) target = $region13
    $region12: #{tpu_custom_call.1} parent=1 // pred_region
      _
    $region13: #{tpu_custom_call.1} parent=1 // pred_fallthru
      _
    // Predicated region
    $region14: #{tpu_custom_call.1} parent=1 // pred_check
      _
    $region15: #{tpu_custom_call.1} parent=1 // pred_check_branch
      %40 = sbr.rel (0) target = $region17
    $region16: #{tpu_custom_call.1} parent=1 // pred_region
      %s42 = ssub.s32 2048, 2048
      %43 = vsyncadd [#allocation7], %s42
      %s44 = sshll.u32 [#allocation8], 4
      %s45 = int_to_ptr.vmem [resolvable:$true] %s44
      %50 = dma.hbm_to_vmem [thread:$0]  %s3, 2048, %s45, [#allocation7], 128, 128, 8
    $region17: #{tpu_custom_call.1} parent=1 // pred_fallthru
      _
    // Predicated region
    $region18: #{tpu_custom_call.1} parent=1 // pred_check
      _
    $region19: #{tpu_custom_call.1} parent=1 // pred_check_branch
      %52 = sbr.rel (0) target = $region21
    $region20: #{tpu_custom_call.1} parent=1 // pred_region
      _
    $region21: #{tpu_custom_call.1} parent=1 // pred_fallthru
      _
    // Predicated region
    $region22: #{tpu_custom_call.1} parent=1 // pred_check
      _
    $region23: #{tpu_custom_call.1} parent=1 // pred_check_branch
      %54 = sbr.rel (0) target = $region25
    $region24: #{tpu_custom_call.1} parent=1 // pred_region
      %55 = dma.done [#allocation4], 256
    $region25: #{tpu_custom_call.1} parent=1 // pred_fallthru
      _
    // Predicated region
    $region26: #{tpu_custom_call.1} parent=1 // pred_check
      _
    $region27: #{tpu_custom_call.1} parent=1 // pred_check_branch
      %57 = sbr.rel (0) target = $region29
    $region28: #{tpu_custom_call.1} parent=1 // pred_region
      %58 = dma.done [#allocation7], 2048
    $region29: #{tpu_custom_call.1} parent=1 // pred_fallthru
      _
    // Predicated region
    $region30: #{tpu_custom_call.1} parent=1 // pred_check
      _
    $region31: #{tpu_custom_call.1} parent=1 // pred_check_branch
      %60 = sbr.rel (0) target = $region33
    $region32: #{tpu_custom_call.1} parent=1 // pred_region
      %61 = dma.done [#allocation7], 2048
    $region33: #{tpu_custom_call.1} parent=1 // pred_fallthru
      _
    %p62 = scmp.eq.s32.totalorder 0, 0
    // Predicated region
    $region34: #{tpu_custom_call.1} parent=1 // pred_check
      %p63 = pneg %p62
    $region35: #{tpu_custom_call.1} parent=1 // pred_check_branch
      %65 = sbr.rel (%p63) target = $region37
    $region36: #{tpu_custom_call.1} parent=1 // pred_region
      %66 = vst [vmem:[#allocation2] sm:$0xff] 0.0
      %67 = vst [vmem:[#allocation2 + $0x8] sm:$0xff] 0.0
    $region37: #{tpu_custom_call.1} parent=1 // pred_fallthru
      _
    %v68 = vld [vmem:[#allocation3] sm:$0xff]
    %v69 = vld [vmem:[#allocation3 + $0x8] sm:$0xff]
    %v70 = vld [vmem:[#allocation6] sm:$0xff]
    %v71 = vld [vmem:[#allocation6 + $0x8] sm:$0xff]
    %v72 = vld [vmem:[#allocation6 + $0x10] sm:$0xff]
    %v73 = vld [vmem:[#allocation6 + $0x18] sm:$0xff]
    %v74 = vld [vmem:[#allocation6 + $0x20] sm:$0xff]
    %v75 = vld [vmem:[#allocation6 + $0x28] sm:$0xff]
    %v76 = vld [vmem:[#allocation6 + $0x30] sm:$0xff]
    %v77 = vld [vmem:[#allocation6 + $0x38] sm:$0xff]
    %v78 = vld [vmem:[#allocation6 + $0x40] sm:$0xff]
    %v79 = vld [vmem:[#allocation6 + $0x48] sm:$0xff]
    %v80 = vld [vmem:[#allocation6 + $0x50] sm:$0xff]
    %v81 = vld [vmem:[#allocation6 + $0x58] sm:$0xff]
    %v82 = vld [vmem:[#allocation6 + $0x60] sm:$0xff]
    %v83 = vld [vmem:[#allocation6 + $0x68] sm:$0xff]
    %v84 = vld [vmem:[#allocation6 + $0x70] sm:$0xff]
    %v85 = vld [vmem:[#allocation6 + $0x78] sm:$0xff]
    %v86 = vld [vmem:[%s2] sm:$0x1]
    %v88 = vlaneseq
    %v89 = vshrl.u32 %v88, 7
    %v90 = vsub.s32 0, %v89
    %v91 = vrot.slane %v86, %v90
    %93 = vmatprep.subr.mxu0 0.0
    %94 = vmatpush1.msra.mxu0 %v85
    %95 = vmatprep.subr.mxu0 0.0
    %96 = vmatpush1.msra.mxu0 %v84
    %97 = vmatprep.subr.mxu0 0.0
    %98 = vmatpush1.msra.mxu0 %v83
    %99 = vmatprep.subr.mxu0 0.0
    %100 = vmatpush1.msra.mxu0 %v82
    %101 = vmatprep.subr.mxu0 0.0
    %102 = vmatpush1.msra.mxu0 %v81
    %103 = vmatprep.subr.mxu0 0.0
    %104 = vmatpush1.msra.mxu0 %v80
    %105 = vmatprep.subr.mxu0 0.0
    %106 = vmatpush1.msra.mxu0 %v79
    %107 = vmatprep.subr.mxu0 0.0
    %108 = vmatpush1.msra.mxu0 %v78
    %109 = vmatprep.subr.mxu0 0.0
    %110 = vmatpush1.msra.mxu0 %v77
    %111 = vmatprep.subr.mxu0 0.0
    %112 = vmatpush1.msra.mxu0 %v76
    %113 = vmatprep.subr.mxu0 0.0
    %114 = vmatpush1.msra.mxu0 %v75
    %115 = vmatprep.subr.mxu0 0.0
    %116 = vmatpush1.msra.mxu0 %v74
    %117 = vmatprep.subr.mxu0 0.0
    %118 = vmatpush1.msra.mxu0 %v73
    %119 = vmatprep.subr.mxu0 0.0
    %120 = vmatpush1.msra.mxu0 %v72
    %121 = vmatprep.subr.mxu0 0.0
    %122 = vmatpush1.msra.mxu0 %v71
    %123 = vmatprep.subr.mxu0 0.0
    %124 = vmatpush1.msra.mxu0 %v70
    %125 = vmatprep.subr.mxu0 0.0
    %126 = vmatpush2.msra.mxu0 0.0
    %127 = vmatprep.subr.mxu0 0.0
    %128 = vmatpush2.msra.mxu0 0.0
    %129 = vmatprep.subr.mxu0 0.0
    %130 = vmatpush2.msra.mxu0 0.0
    %131 = vmatprep.subr.mxu0 0.0
    %132 = vmatpush2.msra.mxu0 0.0
    %133 = vmatprep.subr.mxu0 0.0
    %134 = vmatpush2.msra.mxu0 0.0
    %135 = vmatprep.subr.mxu0 0.0
    %136 = vmatpush2.msra.mxu0 0.0
    %137 = vmatprep.subr.mxu0 0.0
    %138 = vmatpush2.msra.mxu0 0.0
    %139 = vmatprep.subr.mxu0 0.0
    %140 = vmatpush2.msra.mxu0 0.0
    %141 = vmatprep.subr.mxu0 0.0
    %142 = vmatpush2.msra.mxu0 0.0
    %143 = vmatprep.subr.mxu0 0.0
    %144 = vmatpush2.msra.mxu0 0.0
    %145 = vmatprep.subr.mxu0 0.0
    %146 = vmatpush2.msra.mxu0 0.0
    %147 = vmatprep.subr.mxu0 0.0
    %148 = vmatpush2.msra.mxu0 0.0
    %149 = vmatprep.subr.mxu0 0.0
    %150 = vmatpush2.msra.mxu0 0.0
    %151 = vmatprep.subr.mxu0 0.0
    %152 = vmatpush2.msra.mxu0 0.0
    %153 = vmatprep.subr.mxu0 0.0
    %154 = vmatpush2.msra.mxu0 0.0
    %155 = vmatprep.subr.mxu0 0.0
    %156 = vmatpush2.msra.mxu0 0.0
    %157 = vmatprep.mubr.f32.mxu0 0.0
    %158 = vmatmul.mubr.f32.gmra.mxu0 %v68
    %v159 = vpop.f32.mrf.mxu0
    %v160 = vadd.f32 %v91, %v159
    %v161 = vpop.f32.mrf.mxu0
    %162 = vmatprep.mubr.f32.mxu0 0.0
    %163 = vmatmul.mubr.f32.gmra.mxu0 %v69
    %v164 = vpop.f32.mrf.mxu0
    %v165 = vadd.f32 %v91, %v164
    %v166 = vpop.f32.mrf.mxu0
    %167 = vdwg.mxu0
    %v168 = vmax.f32 %v160, 0.0
    %v169 = vmax.f32 %v165, 0.0
    %v170 = vld [vmem:[#allocation2] sm:$0xff]
    %v171 = vld [vmem:[#allocation2 + $0x8] sm:$0xff]
    %v172 = vld [vmem:[#allocation8] sm:$0xff]
    %v173 = vld [vmem:[#allocation8 + $0x8] sm:$0xff]
    %v174 = vld [vmem:[#allocation8 + $0x10] sm:$0xff]
    %v175 = vld [vmem:[#allocation8 + $0x18] sm:$0xff]
    %v176 = vld [vmem:[#allocation8 + $0x20] sm:$0xff]
    %v177 = vld [vmem:[#allocation8 + $0x28] sm:$0xff]
    %v178 = vld [vmem:[#allocation8 + $0x30] sm:$0xff]
    %v179 = vld [vmem:[#allocation8 + $0x38] sm:$0xff]
    %v180 = vld [vmem:[#allocation8 + $0x40] sm:$0xff]
    %v181 = vld [vmem:[#allocation8 + $0x48] sm:$0xff]
    %v182 = vld [vmem:[#allocation8 + $0x50] sm:$0xff]
    %v183 = vld [vmem:[#allocation8 + $0x58] sm:$0xff]
    %v184 = vld [vmem:[#allocation8 + $0x60] sm:$0xff]
    %v185 = vld [vmem:[#allocation8 + $0x68] sm:$0xff]
    %v186 = vld [vmem:[#allocation8 + $0x70] sm:$0xff]
    %v187 = vld [vmem:[#allocation8 + $0x78] sm:$0xff]
    %188 = vmatprep.subr.mxu0 0.0
    %189 = vmatpush1.msra.mxu0 %v187
    %190 = vmatprep.subr.mxu0 0.0
    %191 = vmatpush1.msra.mxu0 %v186
    %192 = vmatprep.subr.mxu0 0.0
    %193 = vmatpush1.msra.mxu0 %v185
    %194 = vmatprep.subr.mxu0 0.0
    %195 = vmatpush1.msra.mxu0 %v184
    %196 = vmatprep.subr.mxu0 0.0
    %197 = vmatpush1.msra.mxu0 %v183
    %198 = vmatprep.subr.mxu0 0.0
    %199 = vmatpush1.msra.mxu0 %v182
    %200 = vmatprep.subr.mxu0 0.0
    %201 = vmatpush1.msra.mxu0 %v181
    %202 = vmatprep.subr.mxu0 0.0
    %203 = vmatpush1.msra.mxu0 %v180
    %204 = vmatprep.subr.mxu0 0.0
    %205 = vmatpush1.msra.mxu0 %v179
    %206 = vmatprep.subr.mxu0 0.0
    %207 = vmatpush1.msra.mxu0 %v178
    %208 = vmatprep.subr.mxu0 0.0
    %209 = vmatpush1.msra.mxu0 %v177
    %210 = vmatprep.subr.mxu0 0.0
    %211 = vmatpush1.msra.mxu0 %v176
    %212 = vmatprep.subr.mxu0 0.0
    %213 = vmatpush1.msra.mxu0 %v175
    %214 = vmatprep.subr.mxu0 0.0
    %215 = vmatpush1.msra.mxu0 %v174
    %216 = vmatprep.subr.mxu0 0.0
    %217 = vmatpush1.msra.mxu0 %v173
    %218 = vmatprep.subr.mxu0 0.0
    %219 = vmatpush1.msra.mxu0 %v172
    %220 = vmatprep.subr.mxu0 0.0
    %221 = vmatpush2.msra.mxu0 0.0
    %222 = vmatprep.subr.mxu0 0.0
    %223 = vmatpush2.msra.mxu0 0.0
    %224 = vmatprep.subr.mxu0 0.0
    %225 = vmatpush2.msra.mxu0 0.0
    %226 = vmatprep.subr.mxu0 0.0
    %227 = vmatpush2.msra.mxu0 0.0
    %228 = vmatprep.subr.mxu0 0.0
    %229 = vmatpush2.msra.mxu0 0.0
    %230 = vmatprep.subr.mxu0 0.0
    %231 = vmatpush2.msra.mxu0 0.0
    %232 = vmatprep.subr.mxu0 0.0
    %233 = vmatpush2.msra.mxu0 0.0
    %234 = vmatprep.subr.mxu0 0.0
    %235 = vmatpush2.msra.mxu0 0.0
    %236 = vmatprep.subr.mxu0 0.0
    %237 = vmatpush2.msra.mxu0 0.0
    %238 = vmatprep.subr.mxu0 0.0
    %239 = vmatpush2.msra.mxu0 0.0
    %240 = vmatprep.subr.mxu0 0.0
    %241 = vmatpush2.msra.mxu0 0.0
    %242 = vmatprep.subr.mxu0 0.0
    %243 = vmatpush2.msra.mxu0 0.0
    %244 = vmatprep.subr.mxu0 0.0
    %245 = vmatpush2.msra.mxu0 0.0
    %246 = vmatprep.subr.mxu0 0.0
    %247 = vmatpush2.msra.mxu0 0.0
    %248 = vmatprep.subr.mxu0 0.0
    %249 = vmatpush2.msra.mxu0 0.0
    %250 = vmatprep.subr.mxu0 0.0
    %251 = vmatpush2.msra.mxu0 0.0
    %252 = vmatprep.mubr.f32.mxu0 0.0
    %253 = vmatmul.mubr.f32.gmra.mxu0 %v168
    %v254 = vpop.f32.mrf.mxu0
    %v255 = vadd.f32 0.0, %v254
    %v256 = vpop.f32.mrf.mxu0
    %257 = vmatprep.mubr.f32.mxu0 0.0
    %258 = vmatmul.mubr.f32.gmra.mxu0 %v169
    %v259 = vpop.f32.mrf.mxu0
    %v260 = vadd.f32 0.0, %v259
    %v261 = vpop.f32.mrf.mxu0
    %262 = vdwg.mxu0
    %v263 = vadd.f32 %v170, %v255
    %v264 = vadd.f32 %v171, %v260
    %265 = vst [vmem:[#allocation2] sm:$0xff] %v263
    %266 = vst [vmem:[#allocation2 + $0x8] sm:$0xff] %v264
    // Predicated region
    $region38: #{tpu_custom_call.1} parent=1 // pred_check
      %p267 = pneg %p62
    $region39: #{tpu_custom_call.1} parent=1 // pred_check_branch
      %269 = sbr.rel (%p267) target = $region41
    $region40: #{tpu_custom_call.1} parent=1 // pred_region
      %v270 = vld [vmem:[%s4] sm:$0x7]
      %v271 = vld [vmem:[#allocation2] sm:$0xff]
      %v272 = vld [vmem:[#allocation2 + $0x8] sm:$0xff]
      %v273 = vlaneseq
      %v274 = vshrl.u32 %v273, 7
      %v275 = vsub.s32 0, %v274
      %v276 = vrot.slane %v270, %v275
      %v277 = vadd.f32 %v271, %v276
      %v278 = vadd.f32 %v272, %v276
      %v279 = vadd.f32 %v277, %v68
      %v280 = vadd.f32 %v278, %v69
      %281 = vadd.xlane.f32.xlu0 %v279
      %v282 = vpop.xlane.xlu0 %281
      %283 = vadd.xlane.f32.xlu0 %v280
      %v284 = vpop.xlane.xlu0 %283
      %v285 = vmul.f32 %v282, 0.03125
      %v286 = vmul.f32 %v284, 0.03125
      %v287 = vlaneseq
      %v288 = vand.u32 %v287, 127
      %vm289 = vcmp.lt.s32.totalorder %v288, 32
      %v290 = vsub.f32 %v279, %v285
      %v291 = vsub.f32 %v280, %v286
      %v292 = vsel %vm289, %v290, 0.0
      %v293 = vsel %vm289, %v291, 0.0
      %v294 = vmul.f32 %v292, %v292
      %v295 = vmul.f32 %v293, %v293
      %296 = vadd.xlane.f32.xlu0 %v294
      %v297 = vpop.xlane.xlu0 %296
      %298 = vadd.xlane.f32.xlu0 %v295
      %v299 = vpop.xlane.xlu0 %298
      %v300 = vmul.f32 %v297, 0.03125
      %v301 = vmul.f32 %v299, 0.03125
      %v302 = vadd.f32 %v300, 1e-06
      %v303 = vadd.f32 %v301, 1e-06
      %v304 = vrsqrt.pop %v302
      %v305 = vrsqrt.pop %v303
      %v306 = vmul.f32 %v292, %v304
      %v307 = vmul.f32 %v293, %v305
      %v308 = vlaneseq
      %v309 = vshrl.u32 %v308, 7
      %v310 = vsub.s32 1, %v309
      %v311 = vrot.slane %v270, %v310
      %v312 = vmul.f32 %v306, %v311
      %v313 = vmul.f32 %v307, %v311
      %v314 = vlaneseq
      %v315 = vshrl.u32 %v314, 7
      %v316 = vsub.s32 2, %v315
      %v317 = vrot.slane %v270, %v316
      %v318 = vadd.f32 %v312, %v317
      %v319 = vadd.f32 %v313, %v317
      %320 = vst [vmem:[#allocation9] sm:$0xff] %v318
      %321 = vst [vmem:[#allocation9 + $0x8] sm:$0xff] %v319
    $region41: #{tpu_custom_call.1} parent=1 // pred_fallthru
      _
    // Predicated region
    $region42: #{tpu_custom_call.1} parent=1 // pred_check
      _
    $region43: #{tpu_custom_call.1} parent=1 // pred_check_branch
      %323 = sbr.rel (0) target = $region45
    $region44: #{tpu_custom_call.1} parent=1 // pred_region
      %s325 = ssub.s32 256, 256
      %326 = vsyncadd [#allocation5], %s325
      %s327 = sshll.u32 [#allocation9], 4
      %s328 = int_to_ptr.vmem [resolvable:$true] %s327
      %333 = dma.vmem_to_hbm [thread:$0]  %s328, 256, %s5, [#allocation5], 128, 128, 8
    $region45: #{tpu_custom_call.1} parent=1 // pred_fallthru
      _
    // Predicated region
    $region46: #{tpu_custom_call.1} parent=1 // pred_check
      _
    $region47: #{tpu_custom_call.1} parent=1 // pred_check_branch
      %335 = sbr.rel (0) target = $region49
    $region48: #{tpu_custom_call.1} parent=1 // pred_region
      %336 = dma.done [#allocation5], 256
    $region49: #{tpu_custom_call.1} parent=1 // pred_fallthru
      _
    %337 = vsyncpa [#allocation4], 1
    %338 = vsyncpa [#allocation7], 1
    %339 = vsyncpa [#allocation5], 1

</llo_original>
